<compile_context>
chip_gen: v6e
topology: v6e:2x2x1
jax: 0.10.0
libtpu: 0.0.40
codegen_flags: <defaults>
</compile_context>

<pallas_src>
import functools
import math

import jax
import jax.numpy as jnp
from jax import lax
from jax.experimental import pallas as pl
from jax.experimental.pallas import tpu as pltpu


def _sigmoid_plus_eps(x, eps):
    # sigmoid(x) + eps == 0.5*tanh(0.5*x) + (0.5 + eps): single EUP transcendental.
    return 0.5 * jnp.tanh(0.5 * x) + (0.5 + eps)


# ---------------------------------------------------------------------------
# Pass 1: per-(b,h) kv statistics  (context_aug = k'^T [v, 1])
# The last column of context_aug is k_sum (ones-column trick).
# ---------------------------------------------------------------------------
def _kv_stats_kernel(p_ref, k_ref, v_ref, ctx_ref, *, eps, m_true):
    nk = pl.program_id(1)

    @pl.when(nk == 0)
    def _():
        ctx_ref[...] = jnp.zeros_like(ctx_ref)

    k = k_ref[0]                                   # (tN, D)   storage dtype
    p = p_ref[...]                                 # (Mpad, D) scale already folded in

    # k' = sigmoid(k @ P_scaled^T) + eps  -- contract over D, no transpose.
    s = lax.dot_general(k, p, (((1,), (1,)), ((), ())),
                        preferred_element_type=jnp.float32)       # (tN, Mpad) f32
    kp = _sigmoid_plus_eps(s, eps)

    # Zero the padded feature columns (sigmoid(0)=0.5 would otherwise corrupt
    # both the context and the implicit k_sum column).
    if m_true != p_ref.shape[0]:
        lane = lax.broadcasted_iota(jnp.int32, kp.shape, 1)
        kp = jnp.where(lane < m_true, kp, 0.0)

    kp = kp.astype(v_ref.dtype)                    # bf16 MXU operands when enabled
    v = v_ref[0]                                   # (tN, Dv+1) -- last col is ones

    # context += k'^T @ [v, 1]   (contract over the sequence rows)
    ctx_ref[...] += lax.dot_general(kp, v, (((0,), (0,)), ((), ())),
                                    preferred_element_type=jnp.float32)[None]


# ---------------------------------------------------------------------------
# Pass 2: per-(b,h, q-tile) output  out = (q' @ ctx)[:, :Dv] / (q' @ ctx)[:, Dv]
# ---------------------------------------------------------------------------
def _attn_out_kernel(p_ref, q_ref, ctx_ref, o_ref, *, eps):
    q = q_ref[0]                                   # (tN, D)
    p = p_ref[...]                                 # (Mpad, D)

    s = lax.dot_general(q, p, (((1,), (1,)), ((), ())),
                        preferred_element_type=jnp.float32)       # (tN, Mpad)
    qp = _sigmoid_plus_eps(s, eps).astype(ctx_ref.dtype)

    outp = jnp.dot(qp, ctx_ref[0], preferred_element_type=jnp.float32)  # (tN, Dv+1)
    dv = o_ref.shape[-1]
    numer = outp[:, :dv]                            # (tN, Dv)
    denom = outp[:, dv:dv + 1]                      # (tN, 1) == q' . k_sum
    o_ref[...] = (numer / denom).astype(o_ref.dtype)[None]


def _pick_seq_tile(n, target=4096):
    """Largest multiple-of-8 divisor of n that is <= target (or n itself)."""
    if n <= target:
        return n
    t = (min(target, n) // 8) * 8
    while t >= 8:
        if n % t == 0:
            return t
        t -= 8
    return n


def fast_attention(q, k, v, projection_matrix, *, kernel_eps=1e-6, seq_tile=4096,
                   mxu_dtype=None):
    """Pallas implementation of FastAttention.forward (generalized sigmoid kernel,
    non-causal linear attention).

    q, k: (B, H, N, D)    v: (B, H, N, Dv)    projection_matrix: (M, D)
    mxu_dtype: optional dtype (e.g. jnp.bfloat16) for MXU operands; accumulation
               and the kernel epilogue stay in f32, output keeps q.dtype.
    returns (B, H, N, Dv)
    """
    B, H, N, D = q.shape
    Dv = v.shape[-1]
    M = projection_matrix.shape[0]
    assert projection_matrix.shape == (M, D)
    assert k.shape == (B, H, N, D) and v.shape == (B, H, N, Dv)

    out_dtype = q.dtype
    compute_dtype = mxu_dtype if mxu_dtype is not None else q.dtype

    # Fold the data normalizer into the projection and pad the feature count to a
    # lane-aligned multiple of 128 (padded k' columns are zeroed inside the kernel).
    scale = float(D) ** -0.25
    Mpad = ((M + 127) // 128) * 128
    p_scaled = projection_matrix.astype(jnp.float32) * scale
    if Mpad != M:
        p_scaled = jnp.pad(p_scaled, ((0, Mpad - M), (0, 0)))
    p_scaled = p_scaled.astype(compute_dtype)

    BH = B * H
    qf = q.reshape(BH, N, D).astype(compute_dtype)
    kf = k.reshape(BH, N, D).astype(compute_dtype)
    vf = v.reshape(BH, N, Dv).astype(compute_dtype)
    # Ones column carries k_sum through the context matmul.
    v_aug = jnp.concatenate(
        [vf, jnp.ones((BH, N, 1), dtype=compute_dtype)], axis=-1)          # (BH,N,Dv+1)

    tN = _pick_seq_tile(N, seq_tile)
    n_tiles = N // tN

    kv_kernel = functools.partial(_kv_stats_kernel, eps=kernel_eps, m_true=M)
    ctx = pl.pallas_call(
        kv_kernel,
        out_shape=jax.ShapeDtypeStruct((BH, Mpad, Dv + 1), jnp.float32),
        grid_spec=pltpu.PrefetchScalarGridSpec(
            num_scalar_prefetch=0,
            grid=(BH, n_tiles),
            in_specs=[
                pl.BlockSpec((Mpad, D), lambda bh, nk: (0, 0)),             # projection
                pl.BlockSpec((1, tN, D), lambda bh, nk: (bh, nk, 0)),       # k tile
                pl.BlockSpec((1, tN, Dv + 1), lambda bh, nk: (bh, nk, 0)),  # [v,1] tile
            ],
            out_specs=pl.BlockSpec((1, Mpad, Dv + 1), lambda bh, nk: (bh, 0, 0)),
        ),
        compiler_params=pltpu.CompilerParams(
            dimension_semantics=("parallel", "arbitrary")),
    )(p_scaled, kf, v_aug)

    # Keep both q'@ctx operands in the MXU compute dtype (tiny array, cheap cast).
    ctx_in = ctx.astype(compute_dtype)

    out_kernel = functools.partial(_attn_out_kernel, eps=kernel_eps)
    out = pl.pallas_call(
        out_kernel,
        out_shape=jax.ShapeDtypeStruct((BH, N, Dv), out_dtype),
        grid_spec=pltpu.PrefetchScalarGridSpec(
            num_scalar_prefetch=0,
            grid=(BH, n_tiles),
            in_specs=[
                pl.BlockSpec((Mpad, D), lambda bh, nq: (0, 0)),             # projection
                pl.BlockSpec((1, tN, D), lambda bh, nq: (bh, nq, 0)),       # q tile
                pl.BlockSpec((1, Mpad, Dv + 1), lambda bh, nq: (bh, 0, 0)), # context
            ],
            out_specs=pl.BlockSpec((1, tN, Dv), lambda bh, nq: (bh, nq, 0)),
        ),
        compiler_params=pltpu.CompilerParams(
            dimension_semantics=("parallel", "parallel")),
    )(p_scaled, qf, ctx_in)

    return out.reshape(B, H, N, Dv)


# ---------------------------------------------------------------------------
# Module "parameter" (buffer) construction: gaussian orthogonal random matrix
# (host/XLA-side setup, not part of the hot forward pass).
# ---------------------------------------------------------------------------
def gaussian_orthogonal_random_matrix(key, nb_rows, nb_cols, scaling=0):
    nb_full_blocks = nb_rows // nb_cols
    keys = jax.random.split(key, nb_full_blocks + 2)
    blocks = []
    for i in range(nb_full_blocks):
        g = jax.random.normal(keys[i], (nb_cols, nb_cols), dtype=jnp.float32)
        qm, _ = jnp.linalg.qr(g)
        blocks.append(qm.T)
    remaining = nb_rows - nb_full_blocks * nb_cols
    if remaining > 0:
        g = jax.random.normal(keys[nb_full_blocks], (nb_cols, nb_cols),
                              dtype=jnp.float32)
        qm, _ = jnp.linalg.qr(g)
        blocks.append(qm.T[:remaining])
    final = jnp.concatenate(blocks, axis=0)
    if scaling == 0:
        multiplier = jnp.linalg.norm(
            jax.random.normal(keys[-1], (nb_rows, nb_cols), dtype=jnp.float32),
            axis=1)
    elif scaling == 1:
        multiplier = math.sqrt(float(nb_cols)) * jnp.ones((nb_rows,), jnp.float32)
    else:
        raise ValueError(f"Invalid scaling {scaling}")
    return multiplier[:, None] * final


# ---------------------------------------------------------------------------
# Pure-JAX reference mirroring the PyTorch forward
# ---------------------------------------------------------------------------
def fast_attention_ref(q, k, v, projection_matrix, kernel_eps=1e-6):
    d = q.shape[-1]
    scale = float(d) ** -0.25

    def phi(x):
        x_dash = jnp.einsum("bhnd,md->bhnm", scale * x, projection_matrix)
        return jax.nn.sigmoid(x_dash) + kernel_eps

    qp, kp = phi(q), phi(k)
    k_sum = kp.sum(axis=-2)                                          # (b,h,m)
    d_inv = 1.0 / jnp.einsum("bhnm,bhm->bhn", qp, k_sum)             # (b,h,n)
    context = jnp.einsum("bhnm,bhne->bhme", kp, v)                   # (b,h,m,e)
    out = jnp.einsum("bhme,bhnm,bhn->bhne", context, qp, d_inv)      # (b,h,n,e)
    return out


if __name__ == "__main__":
    # Small shapes consistent with the module defaults:
    #   dim_heads = 32  ->  nb_features = int(32 * ln 32) = 110 (padded to 128 inside)
    dim_heads = 32
    nb_features = int(dim_heads * math.log(dim_heads))   # 110
    B, H, N = 2, 4, 16

    key = jax.random.PRNGKey(0)
    kq, kk, kv_, kp_ = jax.random.split(key, 4)
    q = jax.random.normal(kq, (B, H, N, dim_heads), dtype=jnp.float32)
    k = jax.random.normal(kk, (B, H, N, dim_heads), dtype=jnp.float32)
    v = jax.random.normal(kv_, (B, H, N, dim_heads), dtype=jnp.float32)
    proj = gaussian_orthogonal_random_matrix(kp_, nb_features, dim_heads, scaling=0)

    ref = fast_attention_ref(q, k, v, proj)

    # seq_tile=8 forces a multi-step reduction over the kv axis (2 tiles of 8),
    # exercising the accumulator path even at this toy sequence length.
    out = fast_attention(q, k, v, proj, seq_tile=8)
    out = jax.block_until_ready(out)
    assert out.shape == ref.shape, (out.shape, ref.shape)
    err = float(jnp.max(jnp.abs(out - ref)))
    assert jnp.allclose(out, ref, rtol=1e-4, atol=1e-4), ("f32 max abs err", err)

    # bf16-MXU fast path (native bf16 matmul rate on v5e/v6e/v7x); relaxed tolerance.
    out_bf16 = fast_attention(q, k, v, proj, seq_tile=8, mxu_dtype=jnp.bfloat16)
    out_bf16 = jax.block_until_ready(out_bf16)
    err_bf16 = float(jnp.max(jnp.abs(out_bf16.astype(jnp.float32) - ref)))
    assert err_bf16 < 1e-1, ("bf16 max abs err", err_bf16)

    print("KERNEL_OK")
</pallas_src>

<mosaic_0001>
module attributes {stable_mosaic.version = 11 : i64} {
  func.func @_kv_stats_kernel(%arg0: i32, %arg1: i32, %arg2: memref<128x32xf32, #tpu.memory_space<vmem>>, %arg3: memref<1x8x32xf32, #tpu.memory_space<vmem>>, %arg4: memref<1x8x33xf32, #tpu.memory_space<vmem>>, %arg5: memref<1x128x33xf32, #tpu.memory_space<vmem>>) attributes {dimension_semantics = [#tpu.dimension_semantics<parallel>, #tpu.dimension_semantics<arbitrary>], iteration_bounds = array<i64: 8, 2>, scalar_prefetch = 0 : i64, scratch_operands = 0 : i64, tpu.core_type = #tpu.core_type<tc>, window_params = [{pipeline_mode = #tpu.pipeline_mode<synchronous>, transform_indices = @transform_0, window_bounds = array<i64: 128, 32>}, {transform_indices = @transform_1, window_bounds = array<i64: 1, 8, 32>}, {transform_indices = @transform_2, window_bounds = array<i64: 1, 8, 33>}, {transform_indices = @transform_3, window_bounds = array<i64: 1, 128, 33>}]} {
    %c0_i32 = arith.constant 0 : i32
    %0 = arith.cmpi eq, %arg1, %c0_i32 : i32
    %1 = arith.extui %0 : i1 to i32
    %c0_i32_0 = arith.constant 0 : i32
    %2 = arith.cmpi ne, %1, %c0_i32_0 : i32
    scf.if %2 {
      %cst_19 = arith.constant 0.000000e+00 : f32
      %26 = vector.broadcast %cst_19 : f32 to vector<1x128x33xf32>
      %c0_20 = arith.constant 0 : index
      %c0_21 = arith.constant 0 : index
      %c0_22 = arith.constant 0 : index
      %27 = vector.load %arg5[%c0_20, %c0_21, %c0_22] : memref<1x128x33xf32, #tpu.memory_space<vmem>>, vector<1x128x33xf32>
      tpu.vector_store %arg5[%c0_20, %c0_21, %c0_22], %26 {strides = array<i32>} : memref<1x128x33xf32, #tpu.memory_space<vmem>>, vector<1x128x33xf32>,
    } else {
    }
    %c0 = arith.constant 0 : index
    %c0_1 = arith.constant 0 : index
    %c0_2 = arith.constant 0 : index
    %3 = vector.load %arg3[%c0, %c0_1, %c0_2] : memref<1x8x32xf32, #tpu.memory_space<vmem>>, vector<1x8x32xf32>
    %4 = vector.shape_cast %3 : vector<1x8x32xf32> to vector<8x32xf32>
    %c0_3 = arith.constant 0 : index
    %c0_4 = arith.constant 0 : index
    %5 = vector.load %arg2[%c0_3, %c0_4] : memref<128x32xf32, #tpu.memory_space<vmem>>, vector<128x32xf32>
    %cst = arith.constant dense<0.000000e+00> : vector<8x128xf32>
    %6 = tpu.matmul %4, %5, %cst {dimension_numbers = #tpu.dot_dimension_numbers<[1], [1], [0], [0], [0, 0, 1, 0], [], []>} : vector<8x32xf32>, vector<128x32xf32>, vector<8x128xf32> -> vector<8x128xf32>
    %cst_5 = arith.constant 5.000000e-01 : f32
    %7 = vector.broadcast %cst_5 : f32 to vector<8x128xf32>
    %8 = arith.mulf %7, %6 : vector<8x128xf32>
    %9 = math.tanh %8 : vector<8x128xf32>
    %cst_6 = arith.constant 5.000000e-01 : f32
    %10 = vector.broadcast %cst_6 : f32 to vector<8x128xf32>
    %11 = arith.mulf %10, %9 : vector<8x128xf32>
    %cst_7 = arith.constant 5.000010e-01 : f32
    %12 = vector.broadcast %cst_7 : f32 to vector<8x128xf32>
    %13 = arith.addf %11, %12 : vector<8x128xf32>
    %14 = tpu.iota {dimensions = array<i32: 1>} : vector<8x128xi32>
    %c110_i32 = arith.constant 110 : i32
    %15 = vector.broadcast %c110_i32 : i32 to vector<8x128xi32>
    %16 = arith.cmpi slt, %14, %15 : vector<8x128xi32>
    %cst_8 = arith.constant 0.000000e+00 : f32
    %17 = vector.broadcast %cst_8 : f32 to vector<8x128xf32>
    %18 = arith.select %16, %13, %17 : vector<8x128xi1>, vector<8x128xf32>
    %c0_9 = arith.constant 0 : index
    %c0_10 = arith.constant 0 : index
    %c0_11 = arith.constant 0 : index
    %19 = vector.load %arg4[%c0_9, %c0_10, %c0_11] : memref<1x8x33xf32, #tpu.memory_space<vmem>>, vector<1x8x33xf32>
    %20 = vector.shape_cast %19 : vector<1x8x33xf32> to vector<8x33xf32>
    %c0_12 = arith.constant 0 : index
    %c0_13 = arith.constant 0 : index
    %c0_14 = arith.constant 0 : index
    %21 = vector.load %arg5[%c0_12, %c0_13, %c0_14] : memref<1x128x33xf32, #tpu.memory_space<vmem>>, vector<1x128x33xf32>
    %cst_15 = arith.constant dense<0.000000e+00> : vector<128x33xf32>
    %22 = tpu.matmul %18, %20, %cst_15 {dimension_numbers = #tpu.dot_dimension_numbers<[0], [0], [1], [1], [0, 1, 1, 1], [], []>} : vector<8x128xf32>, vector<8x33xf32>, vector<128x33xf32> -> vector<128x33xf32>
    %23 = vector.shape_cast %22 : vector<128x33xf32> to vector<1x128x33xf32>
    %24 = arith.addf %21, %23 : vector<1x128x33xf32>
    %c0_16 = arith.constant 0 : index
    %c0_17 = arith.constant 0 : index
    %c0_18 = arith.constant 0 : index
    %25 = vector.load %arg5[%c0_16, %c0_17, %c0_18] : memref<1x128x33xf32, #tpu.memory_space<vmem>>, vector<1x128x33xf32>
    tpu.vector_store %arg5[%c0_16, %c0_17, %c0_18], %24 {strides = array<i32>} : memref<1x128x33xf32, #tpu.memory_space<vmem>>, vector<1x128x33xf32>,
    return
  }
  func.func @transform_0(%arg0: i32, %arg1: i32) -> (i32, i32) {
    %c0_i32 = arith.constant 0 : i32
    %c0_i32_0 = arith.constant 0 : i32
    %c0_i32_1 = arith.constant 0 : i32
    return %c0_i32, %c0_i32_0 : i32, i32
  }
  func.func @transform_1(%arg0: i32, %arg1: i32) -> (i32, i32, i32) {
    %c0_i32 = arith.constant 0 : i32
    %c0_i32_0 = arith.constant 0 : i32
    return %arg0, %arg1, %c0_i32 : i32, i32, i32
  }
  func.func @transform_2(%arg0: i32, %arg1: i32) -> (i32, i32, i32) {
    %c0_i32 = arith.constant 0 : i32
    %c0_i32_0 = arith.constant 0 : i32
    return %arg0, %arg1, %c0_i32 : i32, i32, i32
  }
  func.func @transform_3(%arg0: i32, %arg1: i32) -> (i32, i32, i32) {
    %c0_i32 = arith.constant 0 : i32
    %c0_i32_0 = arith.constant 0 : i32
    %c0_i32_1 = arith.constant 0 : i32
    return %arg0, %c0_i32, %c0_i32_0 : i32, i32, i32
  }
}

</mosaic_0001>

<llo_original>
// kernel: tpu_custom_call.1
$region0: #{tpu_custom_call.1}
  #allocation0 [shape = 'u32[]', space=smem, size = 0x4, offset = 0x4, fixed_abs, tag = 'smem constant byte address 0x4 - core index']
  #allocation1 [shape = 'u32[144,128]{1,0:T(1,128)}', space=vmem, size = 0x12000, scoped, tag = 'internal scratch']
  %s0 = inlined_call_operand.vmem [shape: f32[128,32], index: 0, kind: input, shape index: {}]
  %s1 = inlined_call_operand.vmem [shape: f32[8,16,32], index: 1, kind: input, shape index: {}]
  %s2 = inlined_call_operand.hbm [shape: f32[8,16,33], index: 2, kind: input, shape index: {}]
  %s3 = inlined_call_operand.vmem [shape: f32[8,128,33], index: 3, kind: output, shape index: {}]
  %s4 = sld [smem:[#allocation0]]
  $region53: #{tpu_custom_call.1} parent=0
    _
  %s6 = ssub.s32 1, %s4
  %s7 = scalar_select 0, %s6, %s4
  $region1: #{tpu_custom_call.1} parent=0
    #allocation2 [shape = 'u8[8192]{0}', space=vmem, size = 0x2000, scoped, tag = 'input window, operand 2']
    #allocation3 [shape = 's32[2]{0}', space=sflag, size = 0x8, scoped, tag = 'scoped memory for tpu_custom_call.1']
    %8 = vsyncpa [#allocation3], 0
    %s9 = scalar_lea.sflag [#allocation3], 1
    %10 = vsyncpa %s9, 0
    loop: start=0, step=1, limit=18
    $region2: #{tpu_custom_call.1} parent=1 // loop_pre_header
      _
    $region3: #{tpu_custom_call.1} parent=1 // loop_header
      %s12 = sphi 0, %s16
      %p13 = scmp.ge.s32.totalorder %s12, 18
      %s19 = sphi 0, %s31
      %s20 = sphi 0, %s27
      %s21 = sphi 0, %s19
      %s22 = sphi 0, %s20
      %s23 = sphi 0, %s21
      %s24 = sphi 0, %s22
      %s32 = sphi 0, %s32
      %s34 = sphi 0, %s32
      %s35 = sphi 0, %s34
      %s49 = sphi 0, %s35
      %s57 = sphi 0, %s59
      %s60 = sphi 0, %s57
      %s61 = sphi 0, %s60
      %s77 = sphi 0, %s61
      %s85 = sphi 0, %s87
      %s88 = sphi 0, %s85
      %s89 = sphi 0, %s88
      %s105 = sphi 0, %s89
      %s111 = sphi 0, %s113
      %s114 = sphi 0, %s111
      %s115 = sphi 0, %s114
      %s131 = sphi 0, %s115
    $region4: #{tpu_custom_call.1} parent=1 // loop_header_branch
      %15 = sbr.rel (%p13) target = $region8
    $region5: #{tpu_custom_call.1} parent=1 // loop_body
      %s17 = ssub.s32 %s12, 1
      %s18 = ssub.s32 %s12, 2
      %s25 = sadd.s32 1, %s20
      %p26 = scmp.ge.s32.totalorder %s25, 2
      %s27 = scalar_select %p26, 0, %s25
      %s28 = sadd.s32 1, %s19
      %s29 = scalar_select %p26, %s28, %s19
      %p30 = scmp.ge.s32.totalorder %s29, 8
      %s31 = scalar_select %p30, 0, %s29
      %s33 = sadd.s32 %s32, 1
      %p36 = scmp.eq.s32.totalorder %s12, 15
      %p37 = scmp.ne.s32.totalorder %s32, %s34
      %p38 = scmp.eq.s32.totalorder %s12, 0
      %p39 = por %p37, %p38
      %p40 = scmp.ne.s32.totalorder %s32, %s34
      %p41 = scmp.eq.s32.totalorder %s17, 15
      %p42 = por %p40, %p41
      %p43 = scmp.ne.s32.totalorder %s34, %s35
      %p44 = scmp.eq.s32.totalorder %s17, 0
      %p45 = por %p43, %p44
      %p46 = scmp.ne.s32.totalorder %s34, %s35
      %p47 = scmp.eq.s32.totalorder %s18, 15
      %p48 = por %p46, %p47
      %p50 = scmp.ne.s32.totalorder %s35, %s49
      %p51 = scmp.eq.s32.totalorder %s18, 0
      %p52 = por %p50, %p51
      %s53 = ssub.s32 %s19, %s31
      %s54 = ssub.s32 %s20, %s27
      %s55 = sor.u32 %s53, %s54
      %p56 = scmp.eq.s32.totalorder %s55, 0
      %s58 = sadd.s32 %s57, 1
      %s59 = scalar_select %p56, %s57, %s58
      %p62 = pneg %p56
      %p63 = scmp.eq.s32.totalorder %s12, 15
      %p64 = por %p62, %p63
      %p65 = scmp.ne.s32.totalorder %s57, %s60
      %p66 = scmp.eq.s32.totalorder %s12, 0
      %p67 = por %p65, %p66
      %p68 = scmp.ne.s32.totalorder %s57, %s60
      %p69 = scmp.eq.s32.totalorder %s17, 15
      %p70 = por %p68, %p69
      %p71 = scmp.ne.s32.totalorder %s60, %s61
      %p72 = scmp.eq.s32.totalorder %s17, 0
      %p73 = por %p71, %p72
      %p74 = scmp.ne.s32.totalorder %s60, %s61
      %p75 = scmp.eq.s32.totalorder %s18, 15
      %p76 = por %p74, %p75
      %p78 = scmp.ne.s32.totalorder %s61, %s77
      %p79 = scmp.eq.s32.totalorder %s18, 0
      %p80 = por %p78, %p79
      %s81 = ssub.s32 %s19, %s31
      %s82 = ssub.s32 %s20, %s27
      %s83 = sor.u32 %s81, %s82
      %p84 = scmp.eq.s32.totalorder %s83, 0
      %s86 = sadd.s32 %s85, 1
      %s87 = scalar_select %p84, %s85, %s86
      %p90 = pneg %p84
      %p91 = scmp.eq.s32.totalorder %s12, 15
      %p92 = por %p90, %p91
      %p93 = scmp.ne.s32.totalorder %s85, %s88
      %p94 = scmp.eq.s32.totalorder %s12, 0
      %p95 = por %p93, %p94
      %p96 = scmp.ne.s32.totalorder %s85, %s88
      %p97 = scmp.eq.s32.totalorder %s17, 15
      %p98 = por %p96, %p97
      %p99 = scmp.ne.s32.totalorder %s88, %s89
      %p100 = scmp.eq.s32.totalorder %s17, 0
      %p101 = por %p99, %p100
      %p102 = scmp.ne.s32.totalorder %s88, %s89
      %p103 = scmp.eq.s32.totalorder %s18, 15
      %p104 = por %p102, %p103
      %p106 = scmp.ne.s32.totalorder %s89, %s105
      %p107 = scmp.eq.s32.totalorder %s18, 0
      %p108 = por %p106, %p107
      %s109 = ssub.s32 %s19, %s31
      %p110 = scmp.eq.s32.totalorder %s109, 0
      %s112 = sadd.s32 %s111, 1
      %s113 = scalar_select %p110, %s111, %s112
      %p116 = pneg %p110
      %p117 = scmp.eq.s32.totalorder %s12, 15
      %p118 = por %p116, %p117
      %p119 = scmp.ne.s32.totalorder %s111, %s114
      %p120 = scmp.eq.s32.totalorder %s12, 0
      %p121 = por %p119, %p120
      %p122 = scmp.ne.s32.totalorder %s111, %s114
      %p123 = scmp.eq.s32.totalorder %s17, 15
      %p124 = por %p122, %p123
      %p125 = scmp.ne.s32.totalorder %s114, %s115
      %p126 = scmp.eq.s32.totalorder %s17, 0
      %p127 = por %p125, %p126
      %p128 = scmp.ne.s32.totalorder %s114, %s115
      %p129 = scmp.eq.s32.totalorder %s18, 15
      %p130 = por %p128, %p129
      %p132 = scmp.ne.s32.totalorder %s115, %s131
      %p133 = scmp.eq.s32.totalorder %s18, 0
      %p134 = por %p132, %p133
      %p135 = scmp.le.s32.totalorder 1, %s12
      %p136 = scmp.lt.s32.totalorder %s12, 17
      %p137 = pnand %p135, %p136
      %p138 = pneg %p137
      // Predicated region
      $region9: #{tpu_custom_call.1} parent=5 // pred_check
        _
      $region10: #{tpu_custom_call.1} parent=5 // pred_check_branch
        %140 = sbr.rel (%p137) target = $region12
      $region11: #{tpu_custom_call.1} parent=5 // pred_region
        %s141 = ssub.s32 %s12, 1
        // Predicated region
        $region13: #{tpu_custom_call.1} parent=11 // pred_check
          %p142 = pneg %p45
        $region14: #{tpu_custom_call.1} parent=11 // pred_check_branch
          %144 = sbr.rel (%p142) target = $region16
        $region15: #{tpu_custom_call.1} parent=11 // pred_region
          _
        $region16: #{tpu_custom_call.1} parent=11 // pred_fallthru
          _
      $region12: #{tpu_custom_call.1} parent=5 // pred_fallthru
        _
      %p145 = scmp.lt.s32.totalorder %s12, 16
      // Predicated region
      $region17: #{tpu_custom_call.1} parent=5 // pred_check
        %p146 = pneg %p145
      $region18: #{tpu_custom_call.1} parent=5 // pred_check_branch
        %148 = sbr.rel (%p146) target = $region20
      $region19: #{tpu_custom_call.1} parent=5 // pred_region
        // Predicated region
        $region21: #{tpu_custom_call.1} parent=19 // pred_check
          %p149 = pneg %p67
        $region22: #{tpu_custom_call.1} parent=19 // pred_check_branch
          %151 = sbr.rel (%p149) target = $region24
        $region23: #{tpu_custom_call.1} parent=19 // pred_region
          %p152 = scmp.lt.s32.totalorder %s19, 7
          %s153 = scalar_select %p152, %s19, 7
          %p154 = scmp.lt.s32.totalorder %s20, 1
          %s155 = scalar_select %p154, %s20, 1
          %s156 = smul.addr %s153, 2
          %s157 = sadd.s32 %s155, %s156
          %s158 = smul.addr %s157, 8
          %s159 = scalar_lea.vmem %s1, %s158
        $region24: #{tpu_custom_call.1} parent=19 // pred_fallthru
          _
        // Predicated region
        $region25: #{tpu_custom_call.1} parent=19 // pred_check
          %p160 = pneg %p95
        $region26: #{tpu_custom_call.1} parent=19 // pred_check_branch
          %162 = sbr.rel (%p160) target = $region28
        $region27: #{tpu_custom_call.1} parent=19 // pred_region
          %s163 = sand.u32 %s85, 1
          %s164 = scalar_lea.sflag [#allocation3], %s163
          %s165 = sand.u32 %s85, 1
          %s166 = smul.addr %s165, 8
          %s167 = scalar_lea.vmem [#allocation2], %s166
          %s169 = ssub.s32 128, 128
          %170 = vsyncadd %s164, %s169
          %s171 = smul.addr %s19, 2
          %s172 = sadd.s32 %s20, %s171
          %s173 = smul.addr %s172, 128
          %s174 = scalar_lea.hbm %s2, %s173
          %s176 = sshll.u32 %s167, 4
          %s177 = int_to_ptr.vmem [resolvable:$true] %s176
          %179 = dma.hbm_to_vmem [thread:$0]  %s174, 128, %s177, %s164
        $region28: #{tpu_custom_call.1} parent=19 // pred_fallthru
          _
      $region20: #{tpu_custom_call.1} parent=5 // pred_fallthru
        _
      %p180 = scmp.le.s32.totalorder 1, %s12
      %p181 = scmp.lt.s32.totalorder %s12, 17
      %p182 = pnand %p180, %p181
      %p183 = pneg %p182
      // Predicated region
      $region29: #{tpu_custom_call.1} parent=5 // pred_check
        _
      $region30: #{tpu_custom_call.1} parent=5 // pred_check_branch
        %185 = sbr.rel (%p182) target = $region32
      $region31: #{tpu_custom_call.1} parent=5 // pred_region
        %s186 = ssub.s32 %s12, 1
        %s187 = sand.u32 %s88, 1
        %s188 = scalar_lea.sflag [#allocation3], %s187
        %s189 = sand.u32 %s88, 1
        %s190 = smul.addr %s189, 8
        %s191 = scalar_lea.vmem [#allocation2], %s190
        // Predicated region
        $region33: #{tpu_custom_call.1} parent=31 // pred_check
          %p192 = pneg %p101
        $region34: #{tpu_custom_call.1} parent=31 // pred_check_branch
          %194 = sbr.rel (%p192) target = $region36
        $region35: #{tpu_custom_call.1} parent=31 // pred_region
          %195 = dma.done %s188, 128
        $region36: #{tpu_custom_call.1} parent=31 // pred_fallthru
          _
        %p196 = pneg %p45
        %p197 = pneg %p42
        %p198 = scmp.lt.s32.totalorder %s21, 7
        %s199 = scalar_select %p198, %s21, 7
        %p200 = scmp.lt.s32.totalorder %s22, 1
        %s201 = scalar_select %p200, %s22, 1
        %s202 = smul.addr %s199, 2
        %s203 = sadd.s32 %s201, %s202
        %s204 = smul.addr %s203, 8
        %s205 = scalar_lea.vmem %s1, %s204
        %p206 = pneg %p73
        %p207 = pneg %p70
        %s208 = sand.u32 %s88, 1
        %s209 = scalar_lea.sflag [#allocation3], %s208
        %s210 = sand.u32 %s88, 1
        %s211 = smul.addr %s210, 8
        %s212 = scalar_lea.vmem [#allocation2], %s211
        %p213 = pneg %p101
        %p214 = pneg %p98
        %p215 = pneg %p127
        %p216 = pneg %p124
        %p217 = scmp.lt.s32.totalorder %s21, 7
        %s218 = scalar_select %p217, %s21, 7
        %s219 = smul.addr %s218, 16
        %s220 = smul.addr %s219, 8
        %s221 = scalar_lea.vmem %s3, %s220
        %p222 = scmp.lt.s32.totalorder %s21, 7
        %s223 = scalar_select %p222, %s21, 7
        %p224 = scmp.lt.s32.totalorder %s22, 1
        %s225 = scalar_select %p224, %s22, 1
        %s226 = smul.addr %s223, 2
        %s227 = sadd.s32 %s225, %s226
        %s228 = smul.addr %s227, 8
        %s229 = scalar_lea.vmem %s1, %s228
        %p230 = scmp.lt.s32.totalorder %s21, 7
        %s231 = scalar_select %p230, %s21, 7
        %s232 = smul.addr %s231, 16
        %s233 = smul.addr %s232, 8
        %s234 = scalar_lea.vmem %s3, %s233
        %p235 = scmp.eq.s32.totalorder %s22, 0
        // Predicated region
        $region37: #{tpu_custom_call.1} parent=31 // pred_check
          %p236 = pneg %p235
        $region38: #{tpu_custom_call.1} parent=31 // pred_check_branch
          %238 = sbr.rel (%p236) target = $region40
        $region39: #{tpu_custom_call.1} parent=31 // pred_region
          %vm239 = vcmask 269312
          %240 = vst.msk [vmem:[%s234] sm:$0xff] %vm239, 0.0
          %241 = vst.msk [vmem:[%s234 + $0x8] sm:$0xff] %vm239, 0.0
          %242 = vst.msk [vmem:[%s234 + $0x10] sm:$0xff] %vm239, 0.0
          %243 = vst.msk [vmem:[%s234 + $0x18] sm:$0xff] %vm239, 0.0
          %244 = vst.msk [vmem:[%s234 + $0x20] sm:$0xff] %vm239, 0.0
          %245 = vst.msk [vmem:[%s234 + $0x28] sm:$0xff] %vm239, 0.0
          %246 = vst.msk [vmem:[%s234 + $0x30] sm:$0xff] %vm239, 0.0
          %247 = vst.msk [vmem:[%s234 + $0x38] sm:$0xff] %vm239, 0.0
          %248 = vst.msk [vmem:[%s234 + $0x40] sm:$0xff] %vm239, 0.0
          %249 = vst.msk [vmem:[%s234 + $0x48] sm:$0xff] %vm239, 0.0
          %250 = vst.msk [vmem:[%s234 + $0x50] sm:$0xff] %vm239, 0.0
          %251 = vst.msk [vmem:[%s234 + $0x58] sm:$0xff] %vm239, 0.0
          %252 = vst.msk [vmem:[%s234 + $0x60] sm:$0xff] %vm239, 0.0
          %253 = vst.msk [vmem:[%s234 + $0x68] sm:$0xff] %vm239, 0.0
          %254 = vst.msk [vmem:[%s234 + $0x70] sm:$0xff] %vm239, 0.0
          %255 = vst.msk [vmem:[%s234 + $0x78] sm:$0xff] %vm239, 0.0
        $region40: #{tpu_custom_call.1} parent=31 // pred_fallthru
          _
        %v256 = vld [vmem:[%s229] sm:$0xff]
        %v257 = vld [vmem:[%s0] sm:$0xff]
        %v258 = vld [vmem:[%s0 + $0x8] sm:$0xff]
        %v259 = vld [vmem:[%s0 + $0x10] sm:$0xff]
        %v260 = vld [vmem:[%s0 + $0x18] sm:$0xff]
        %v261 = vld [vmem:[%s0 + $0x20] sm:$0xff]
        %v262 = vld [vmem:[%s0 + $0x28] sm:$0xff]
        %v263 = vld [vmem:[%s0 + $0x30] sm:$0xff]
        %v264 = vld [vmem:[%s0 + $0x38] sm:$0xff]
        %v265 = vld [vmem:[%s0 + $0x40] sm:$0xff]
        %v266 = vld [vmem:[%s0 + $0x48] sm:$0xff]
        %v267 = vld [vmem:[%s0 + $0x50] sm:$0xff]
        %v268 = vld [vmem:[%s0 + $0x58] sm:$0xff]
        %v269 = vld [vmem:[%s0 + $0x60] sm:$0xff]
        %v270 = vld [vmem:[%s0 + $0x68] sm:$0xff]
        %v271 = vld [vmem:[%s0 + $0x70] sm:$0xff]
        %v272 = vld [vmem:[%s0 + $0x78] sm:$0xff]
        %vm273 = vcmask 261120
        %v275 = vsel %vm273, %v256, 0
        %v278 = vsel %vm273, %v257, 0
        %v281 = vsel %vm273, %v258, 0
        %v284 = vsel %vm273, %v259, 0
        %v287 = vsel %vm273, %v260, 0
        %v290 = vsel %vm273, %v261, 0
        %v293 = vsel %vm273, %v262, 0
        %v296 = vsel %vm273, %v263, 0
        %v299 = vsel %vm273, %v264, 0
        %v302 = vsel %vm273, %v265, 0
        %v305 = vsel %vm273, %v266, 0
        %v308 = vsel %vm273, %v267, 0
        %v311 = vsel %vm273, %v268, 0
        %v314 = vsel %vm273, %v269, 0
        %v317 = vsel %vm273, %v270, 0
        %v320 = vsel %vm273, %v271, 0
        %v323 = vsel %vm273, %v272, 0
        %325 = vmatprep.subr.mxu0 0.0
        %326 = vmatpush1.xpose.msra.mxu0 %v323
        %327 = vmatprep.subr.mxu0 0.0
        %328 = vmatpush1.xpose.msra.mxu0 %v320
        %329 = vmatprep.subr.mxu0 0.0
        %330 = vmatpush1.xpose.msra.mxu0 %v317
        %331 = vmatprep.subr.mxu0 0.0
        %332 = vmatpush1.xpose.msra.mxu0 %v314
        %333 = vmatprep.subr.mxu0 0.0
        %334 = vmatpush1.xpose.msra.mxu0 %v311
        %335 = vmatprep.subr.mxu0 0.0
        %336 = vmatpush1.xpose.msra.mxu0 %v308
        %337 = vmatprep.subr.mxu0 0.0
        %338 = vmatpush1.xpose.msra.mxu0 %v305
        %339 = vmatprep.subr.mxu0 0.0
        %340 = vmatpush1.xpose.msra.mxu0 %v302
        %341 = vmatprep.subr.mxu0 0.0
        %342 = vmatpush1.xpose.msra.mxu0 %v299
        %343 = vmatprep.subr.mxu0 0.0
        %344 = vmatpush1.xpose.msra.mxu0 %v296
        %345 = vmatprep.subr.mxu0 0.0
        %346 = vmatpush1.xpose.msra.mxu0 %v293
        %347 = vmatprep.subr.mxu0 0.0
        %348 = vmatpush1.xpose.msra.mxu0 %v290
        %349 = vmatprep.subr.mxu0 0.0
        %350 = vmatpush1.xpose.msra.mxu0 %v287
        %351 = vmatprep.subr.mxu0 0.0
        %352 = vmatpush1.xpose.msra.mxu0 %v284
        %353 = vmatprep.subr.mxu0 0.0
        %354 = vmatpush1.xpose.msra.mxu0 %v281
        %355 = vmatprep.subr.mxu0 0.0
        %356 = vmatpush1.xpose.msra.mxu0 %v278
        %357 = vmatprep.subr.mxu0 0.0
        %358 = vmatpush2.xpose.msra.mxu0 0.0
        %359 = vmatprep.subr.mxu0 0.0
        %360 = vmatpush2.xpose.msra.mxu0 0.0
        %361 = vmatprep.subr.mxu0 0.0
        %362 = vmatpush2.xpose.msra.mxu0 0.0
        %363 = vmatprep.subr.mxu0 0.0
        %364 = vmatpush2.xpose.msra.mxu0 0.0
        %365 = vmatprep.subr.mxu0 0.0
        %366 = vmatpush2.xpose.msra.mxu0 0.0
        %367 = vmatprep.subr.mxu0 0.0
        %368 = vmatpush2.xpose.msra.mxu0 0.0
        %369 = vmatprep.subr.mxu0 0.0
        %370 = vmatpush2.xpose.msra.mxu0 0.0
        %371 = vmatprep.subr.mxu0 0.0
        %372 = vmatpush2.xpose.msra.mxu0 0.0
        %373 = vmatprep.subr.mxu0 0.0
        %374 = vmatpush2.xpose.msra.mxu0 0.0
        %375 = vmatprep.subr.mxu0 0.0
        %376 = vmatpush2.xpose.msra.mxu0 0.0
        %377 = vmatprep.subr.mxu0 0.0
        %378 = vmatpush2.xpose.msra.mxu0 0.0
        %379 = vmatprep.subr.mxu0 0.0
        %380 = vmatpush2.xpose.msra.mxu0 0.0
        %381 = vmatprep.subr.mxu0 0.0
        %382 = vmatpush2.xpose.msra.mxu0 0.0
        %383 = vmatprep.subr.mxu0 0.0
        %384 = vmatpush2.xpose.msra.mxu0 0.0
        %385 = vmatprep.subr.mxu0 0.0
        %386 = vmatpush2.xpose.msra.mxu0 0.0
        %387 = vmatprep.subr.mxu0 0.0
        %388 = vmatpush2.xpose.msra.mxu0 0.0
        %389 = vmatprep.mubr.f32.mxu0 0.0
        %390 = vmatmul.mubr.f32.gmra.mxu0 %v275
        %v391 = vpop.f32.mrf.mxu0
        %v392 = vadd.f32 0.0, %v391
        %v393 = vpop.f32.mrf.mxu0
        %394 = vdwg.mxu0
        %v395 = vmul.f32 %v392, 0.5
        %v396 = vtanh.pop %v395
        %v397 = vmul.f32 %v396, 0.5
        %v398 = vadd.f32 %v397, 0.500001
        %v399 = vlaneseq
        %v400 = vand.u32 %v399, 127
        %vm401 = vcmp.lt.s32.totalorder %v400, 110
        %v402 = vsel %vm401, %v398, 0.0
        %v403 = vld [vmem:[%s191] sm:$0xff]
        %v404 = vld [vmem:[%s234] sm:$0xff]
        %v405 = vld [vmem:[%s234 + $0x8] sm:$0xff]
        %v406 = vld [vmem:[%s234 + $0x10] sm:$0xff]
        %v407 = vld [vmem:[%s234 + $0x18] sm:$0xff]
        %v408 = vld [vmem:[%s234 + $0x20] sm:$0xff]
        %v409 = vld [vmem:[%s234 + $0x28] sm:$0xff]
        %v410 = vld [vmem:[%s234 + $0x30] sm:$0xff]
        %v411 = vld [vmem:[%s234 + $0x38] sm:$0xff]
        %v412 = vld [vmem:[%s234 + $0x40] sm:$0xff]
        %v413 = vld [vmem:[%s234 + $0x48] sm:$0xff]
        %v414 = vld [vmem:[%s234 + $0x50] sm:$0xff]
        %v415 = vld [vmem:[%s234 + $0x58] sm:$0xff]
        %v416 = vld [vmem:[%s234 + $0x60] sm:$0xff]
        %v417 = vld [vmem:[%s234 + $0x68] sm:$0xff]
        %v418 = vld [vmem:[%s234 + $0x70] sm:$0xff]
        %v419 = vld [vmem:[%s234 + $0x78] sm:$0xff]
        %420 = vxpose.xlu0.b32.start [1/16] %v402, 128
        %421 = vxpose.xlu0.b32.cont [2/16] 0.0, 128
        %422 = vxpose.xlu0.b32.cont [3/16] 0.0, 128
        %423 = vxpose.xlu0.b32.cont [4/16] 0.0, 128
        %424 = vxpose.xlu0.b32.cont [5/16] 0.0, 128
        %425 = vxpose.xlu0.b32.cont [6/16] 0.0, 128
        %426 = vxpose.xlu0.b32.cont [7/16] 0.0, 128
        %427 = vxpose.xlu0.b32.cont [8/16] 0.0, 128
        %428 = vxpose.xlu0.b32.cont [9/16] 0.0, 128
        %429 = vxpose.xlu0.b32.cont [10/16] 0.0, 128
        %430 = vxpose.xlu0.b32.cont [11/16] 0.0, 128
        %431 = vxpose.xlu0.b32.cont [12/16] 0.0, 128
        %432 = vxpose.xlu0.b32.cont [13/16] 0.0, 128
        %433 = vxpose.xlu0.b32.cont [14/16] 0.0, 128
        %434 = vxpose.xlu0.b32.cont [15/16] 0.0, 128
        %435 = vxpose.xlu0.b32.end [16/16] 0.0, 128
        %v436 = vpop.trf.xlu0
        %v437 = vpop.trf.xlu0
        %v438 = vpop.trf.xlu0
        %v439 = vpop.trf.xlu0
        %v440 = vpop.trf.xlu0
        %v441 = vpop.trf.xlu0
        %v442 = vpop.trf.xlu0
        %v443 = vpop.trf.xlu0
        %v444 = vpop.trf.xlu0
        %v445 = vpop.trf.xlu0
        %v446 = vpop.trf.xlu0
        %v447 = vpop.trf.xlu0
        %v448 = vpop.trf.xlu0
        %v449 = vpop.trf.xlu0
        %v450 = vpop.trf.xlu0
        %v451 = vpop.trf.xlu0
        %vm452 = vcmask 64512
        %v454 = vsel %vm452, %v436, 0
        %v457 = vsel %vm452, %v437, 0
        %v460 = vsel %vm452, %v438, 0
        %v463 = vsel %vm452, %v439, 0
        %v466 = vsel %vm452, %v440, 0
        %v469 = vsel %vm452, %v441, 0
        %v472 = vsel %vm452, %v442, 0
        %v475 = vsel %vm452, %v443, 0
        %v478 = vsel %vm452, %v444, 0
        %v481 = vsel %vm452, %v445, 0
        %v484 = vsel %vm452, %v446, 0
        %v487 = vsel %vm452, %v447, 0
        %v490 = vsel %vm452, %v448, 0
        %v493 = vsel %vm452, %v449, 0
        %v496 = vsel %vm452, %v450, 0
        %v499 = vsel %vm452, %v451, 0
        %501 = vmatprep.subr.mxu0 0.0
        %502 = vmatpush1.msra.mxu0 0.0
        %503 = vmatprep.subr.mxu0 0.0
        %504 = vmatpush1.msra.mxu0 0.0
        %505 = vmatprep.subr.mxu0 0.0
        %506 = vmatpush1.msra.mxu0 0.0
        %507 = vmatprep.subr.mxu0 0.0
        %508 = vmatpush1.msra.mxu0 0.0
        %509 = vmatprep.subr.mxu0 0.0
        %510 = vmatpush1.msra.mxu0 0.0
        %511 = vmatprep.subr.mxu0 0.0
        %512 = vmatpush1.msra.mxu0 0.0
        %513 = vmatprep.subr.mxu0 0.0
        %514 = vmatpush1.msra.mxu0 0.0
        %515 = vmatprep.subr.mxu0 0.0
        %516 = vmatpush1.msra.mxu0 0.0
        %517 = vmatprep.subr.mxu0 0.0
        %518 = vmatpush1.msra.mxu0 0.0
        %519 = vmatprep.subr.mxu0 0.0
        %520 = vmatpush1.msra.mxu0 0.0
        %521 = vmatprep.subr.mxu0 0.0
        %522 = vmatpush1.msra.mxu0 0.0
        %523 = vmatprep.subr.mxu0 0.0
        %524 = vmatpush1.msra.mxu0 0.0
        %525 = vmatprep.subr.mxu0 0.0
        %526 = vmatpush1.msra.mxu0 0.0
        %527 = vmatprep.subr.mxu0 0.0
        %528 = vmatpush1.msra.mxu0 0.0
        %529 = vmatprep.subr.mxu0 0.0
        %530 = vmatpush1.msra.mxu0 0.0
        %531 = vmatprep.subr.mxu0 0.0
        %532 = vmatpush1.msra.mxu0 %v403
        %533 = vmatprep.subr.mxu0 0.0
        %534 = vmatpush2.msra.mxu0 0.0
        %535 = vmatprep.subr.mxu0 0.0
        %536 = vmatpush2.msra.mxu0 0.0
        %537 = vmatprep.subr.mxu0 0.0
        %538 = vmatpush2.msra.mxu0 0.0
        %539 = vmatprep.subr.mxu0 0.0
        %540 = vmatpush2.msra.mxu0 0.0
        %541 = vmatprep.subr.mxu0 0.0
        %542 = vmatpush2.msra.mxu0 0.0
        %543 = vmatprep.subr.mxu0 0.0
        %544 = vmatpush2.msra.mxu0 0.0
        %545 = vmatprep.subr.mxu0 0.0
        %546 = vmatpush2.msra.mxu0 0.0
        %547 = vmatprep.subr.mxu0 0.0
        %548 = vmatpush2.msra.mxu0 0.0
        %549 = vmatprep.subr.mxu0 0.0
        %550 = vmatpush2.msra.mxu0 0.0
        %551 = vmatprep.subr.mxu0 0.0
        %552 = vmatpush2.msra.mxu0 0.0
        %553 = vmatprep.subr.mxu0 0.0
        %554 = vmatpush2.msra.mxu0 0.0
        %555 = vmatprep.subr.mxu0 0.0
        %556 = vmatpush2.msra.mxu0 0.0
        %557 = vmatprep.subr.mxu0 0.0
        %558 = vmatpush2.msra.mxu0 0.0
        %559 = vmatprep.subr.mxu0 0.0
        %560 = vmatpush2.msra.mxu0 0.0
        %561 = vmatprep.subr.mxu0 0.0
        %562 = vmatpush2.msra.mxu0 0.0
        %563 = vmatprep.subr.mxu0 0.0
        %564 = vmatpush2.msra.mxu0 0.0
        %565 = vmatprep.mubr.f32.mxu0 0.0
        %566 = vmatmul.mubr.f32.gmra.mxu0 %v454
        %v567 = vpop.f32.mrf.mxu0
        %v568 = vadd.f32 0.0, %v567
        %v569 = vpop.f32.mrf.mxu0
        %570 = vmatprep.mubr.f32.mxu0 0.0
        %571 = vmatmul.mubr.f32.gmra.mxu0 %v457
        %v572 = vpop.f32.mrf.mxu0
        %v573 = vadd.f32 0.0, %v572
        %v574 = vpop.f32.mrf.mxu0
        %575 = vmatprep.mubr.f32.mxu0 0.0
        %576 = vmatmul.mubr.f32.gmra.mxu0 %v460
        %v577 = vpop.f32.mrf.mxu0
        %v578 = vadd.f32 0.0, %v577
        %v579 = vpop.f32.mrf.mxu0
        %580 = vmatprep.mubr.f32.mxu0 0.0
        %581 = vmatmul.mubr.f32.gmra.mxu0 %v463
        %v582 = vpop.f32.mrf.mxu0
        %v583 = vadd.f32 0.0, %v582
        %v584 = vpop.f32.mrf.mxu0
        %585 = vmatprep.mubr.f32.mxu0 0.0
        %586 = vmatmul.mubr.f32.gmra.mxu0 %v466
        %v587 = vpop.f32.mrf.mxu0
        %v588 = vadd.f32 0.0, %v587
        %v589 = vpop.f32.mrf.mxu0
        %590 = vmatprep.mubr.f32.mxu0 0.0
        %591 = vmatmul.mubr.f32.gmra.mxu0 %v469
        %v592 = vpop.f32.mrf.mxu0
        %v593 = vadd.f32 0.0, %v592
        %v594 = vpop.f32.mrf.mxu0
        %595 = vmatprep.mubr.f32.mxu0 0.0
        %596 = vmatmul.mubr.f32.gmra.mxu0 %v472
        %v597 = vpop.f32.mrf.mxu0
        %v598 = vadd.f32 0.0, %v597
        %v599 = vpop.f32.mrf.mxu0
        %600 = vmatprep.mubr.f32.mxu0 0.0
        %601 = vmatmul.mubr.f32.gmra.mxu0 %v475
        %v602 = vpop.f32.mrf.mxu0
        %v603 = vadd.f32 0.0, %v602
        %v604 = vpop.f32.mrf.mxu0
        %605 = vmatprep.mubr.f32.mxu0 0.0
        %606 = vmatmul.mubr.f32.gmra.mxu0 %v478
        %v607 = vpop.f32.mrf.mxu0
        %v608 = vadd.f32 0.0, %v607
        %v609 = vpop.f32.mrf.mxu0
        %610 = vmatprep.mubr.f32.mxu0 0.0
        %611 = vmatmul.mubr.f32.gmra.mxu0 %v481
        %v612 = vpop.f32.mrf.mxu0
        %v613 = vadd.f32 0.0, %v612
        %v614 = vpop.f32.mrf.mxu0
        %615 = vmatprep.mubr.f32.mxu0 0.0
        %616 = vmatmul.mubr.f32.gmra.mxu0 %v484
        %v617 = vpop.f32.mrf.mxu0
        %v618 = vadd.f32 0.0, %v617
        %v619 = vpop.f32.mrf.mxu0
        %620 = vmatprep.mubr.f32.mxu0 0.0
        %621 = vmatmul.mubr.f32.gmra.mxu0 %v487
        %v622 = vpop.f32.mrf.mxu0
        %v623 = vadd.f32 0.0, %v622
        %v624 = vpop.f32.mrf.mxu0
        %625 = vmatprep.mubr.f32.mxu0 0.0
        %626 = vmatmul.mubr.f32.gmra.mxu0 %v490
        %v627 = vpop.f32.mrf.mxu0
        %v628 = vadd.f32 0.0, %v627
        %v629 = vpop.f32.mrf.mxu0
        %630 = vmatprep.mubr.f32.mxu0 0.0
        %631 = vmatmul.mubr.f32.gmra.mxu0 %v493
        %v632 = vpop.f32.mrf.mxu0
        %v633 = vadd.f32 0.0, %v632
        %v634 = vpop.f32.mrf.mxu0
        %635 = vmatprep.mubr.f32.mxu0 0.0
        %636 = vmatmul.mubr.f32.gmra.mxu0 %v496
        %v637 = vpop.f32.mrf.mxu0
        %v638 = vadd.f32 0.0, %v637
        %v639 = vpop.f32.mrf.mxu0
        %640 = vmatprep.mubr.f32.mxu0 0.0
        %641 = vmatmul.mubr.f32.gmra.mxu0 %v499
        %v642 = vpop.f32.mrf.mxu0
        %v643 = vadd.f32 0.0, %v642
        %v644 = vpop.f32.mrf.mxu0
        %645 = vdwg.mxu0
        %v646 = vadd.f32 %v404, %v568
        %v647 = vadd.f32 %v405, %v573
        %v648 = vadd.f32 %v406, %v578
        %v649 = vadd.f32 %v407, %v583
        %v650 = vadd.f32 %v408, %v588
        %v651 = vadd.f32 %v409, %v593
        %v652 = vadd.f32 %v410, %v598
        %v653 = vadd.f32 %v411, %v603
        %v654 = vadd.f32 %v412, %v608
        %v655 = vadd.f32 %v413, %v613
        %v656 = vadd.f32 %v414, %v618
        %v657 = vadd.f32 %v415, %v623
        %v658 = vadd.f32 %v416, %v628
        %v659 = vadd.f32 %v417, %v633
        %v660 = vadd.f32 %v418, %v638
        %v661 = vadd.f32 %v419, %v643
        %vm662 = vcmask 269312
        %663 = vst.msk [vmem:[%s234] sm:$0xff] %vm662, %v646
        %664 = vst.msk [vmem:[%s234 + $0x8] sm:$0xff] %vm662, %v647
        %665 = vst.msk [vmem:[%s234 + $0x10] sm:$0xff] %vm662, %v648
        %666 = vst.msk [vmem:[%s234 + $0x18] sm:$0xff] %vm662, %v649
        %667 = vst.msk [vmem:[%s234 + $0x20] sm:$0xff] %vm662, %v650
        %668 = vst.msk [vmem:[%s234 + $0x28] sm:$0xff] %vm662, %v651
        %669 = vst.msk [vmem:[%s234 + $0x30] sm:$0xff] %vm662, %v652
        %670 = vst.msk [vmem:[%s234 + $0x38] sm:$0xff] %vm662, %v653
        %671 = vst.msk [vmem:[%s234 + $0x40] sm:$0xff] %vm662, %v654
        %672 = vst.msk [vmem:[%s234 + $0x48] sm:$0xff] %vm662, %v655
        %673 = vst.msk [vmem:[%s234 + $0x50] sm:$0xff] %vm662, %v656
        %674 = vst.msk [vmem:[%s234 + $0x58] sm:$0xff] %vm662, %v657
        %675 = vst.msk [vmem:[%s234 + $0x60] sm:$0xff] %vm662, %v658
        %676 = vst.msk [vmem:[%s234 + $0x68] sm:$0xff] %vm662, %v659
        %677 = vst.msk [vmem:[%s234 + $0x70] sm:$0xff] %vm662, %v660
        %678 = vst.msk [vmem:[%s234 + $0x78] sm:$0xff] %vm662, %v661
        %p679 = scmp.lt.s32.totalorder %s21, 7
        %s680 = scalar_select %p679, %s21, 7
        %s681 = smul.addr %s680, 16
        %s682 = smul.addr %s681, 8
        %s683 = scalar_lea.vmem %s3, %s682
        // Predicated region
        $region41: #{tpu_custom_call.1} parent=31 // pred_check
          %p684 = pneg %p124
        $region42: #{tpu_custom_call.1} parent=31 // pred_check_branch
          %686 = sbr.rel (%p684) target = $region44
        $region43: #{tpu_custom_call.1} parent=31 // pred_region
          _
        $region44: #{tpu_custom_call.1} parent=31 // pred_fallthru
          _
      $region32: #{tpu_custom_call.1} parent=5 // pred_fallthru
        _
      %p687 = scmp.le.s32.totalorder 2, %s12
      // Predicated region
      $region45: #{tpu_custom_call.1} parent=5 // pred_check
        %p688 = pneg %p687
      $region46: #{tpu_custom_call.1} parent=5 // pred_check_branch
        %690 = sbr.rel (%p688) target = $region48
      $region47: #{tpu_custom_call.1} parent=5 // pred_region
        %s691 = ssub.s32 %s12, 2
        // Predicated region
        $region49: #{tpu_custom_call.1} parent=47 // pred_check
          %p692 = pneg %p130
        $region50: #{tpu_custom_call.1} parent=47 // pred_check_branch
          %694 = sbr.rel (%p692) target = $region52
        $region51: #{tpu_custom_call.1} parent=47 // pred_region
          %p695 = scmp.lt.s32.totalorder %s23, 7
          %s696 = scalar_select %p695, %s23, 7
          %s697 = smul.addr %s696, 16
          %s698 = smul.addr %s697, 8
          %s699 = scalar_lea.vmem %s3, %s698
        $region52: #{tpu_custom_call.1} parent=47 // pred_fallthru
          _
      $region48: #{tpu_custom_call.1} parent=5 // pred_fallthru
        _
    $region6: #{tpu_custom_call.1} parent=1 // loop_footer
      %s16 = sadd.s32 1, %s12
    $region7: #{tpu_custom_call.1} parent=1 // loop_footer_branch
      %11 = sbr.rel target = $region3
    $region8: #{tpu_custom_call.1} parent=1 // loop_exit
      _
    %700 = vsyncpa [#allocation3], 1
    %s701 = scalar_lea.sflag [#allocation3], 1
    %702 = vsyncpa %s701, 1

</llo_original>
